<compile_context>
chip_gen: v5e
topology: v5e:2x2
jax: 0.10.0
libtpu: 0.0.40
codegen_flags: <defaults>
</compile_context>

<pallas_src>
import math
import functools
from typing import NamedTuple

import jax
import jax.numpy as jnp
from jax.experimental import pallas as pl
from jax.experimental.pallas import tpu as pltpu


def _round_up(x: int, m: int) -> int:
    return ((x + m - 1) // m) * m


class PreparedMemory(NamedTuple):
    keys: jax.Array      # (capacity, key_dim), matmul dtype (f32 or bf16)
    values: jax.Array    # (1, capacity) if value_dim == 1 else (capacity, value_dim)
    key_dim: int
    value_dim: int
    capacity: int


def prepare_memory(keys, values, *, use_bf16: bool = False) -> PreparedMemory:
    """One-time preprocessing of the memory buffers.

    Call this when the memory is (re)written, NOT per query: it hoists the
    optional f32->bf16 cast and the lane-dense relayout of a value_dim==1
    values buffer out of the per-query path.
    """
    capacity, key_dim = keys.shape
    value_dim = values.shape[1]
    dt = jnp.bfloat16 if use_bf16 else jnp.float32
    k = keys if keys.dtype == dt else keys.astype(dt)
    v = values if values.dtype == dt else values.astype(dt)
    if value_dim == 1:
        v = v.reshape(1, capacity)   # lane-dense row of values
    return PreparedMemory(k, v, key_dim, value_dim, capacity)


def _hopfield_kernel(count_ref, q_ref, k_ref, v_ref, o_ref, *,
                     inv_scale, values_lane_dense):
    """Associative retrieval for one tile of queries.

    count_ref : SMEM (1,) int32 -- number of valid memory rows (item_count)
    q_ref     : (TB, key_dim)            matmul dtype (f32 or bf16)
    k_ref     : (capacity, key_dim)      whole array, resident in VMEM
    v_ref     : (1, capacity) or (capacity, value_dim), resident in VMEM
    o_ref     : (TB, value_dim)          f32
    """
    count = count_ref[0]

    # Fold 1/sqrt(key_dim) into q (TB x key_dim is cheaper than TB x capacity).
    qs = q_ref[...] * jnp.asarray(inv_scale, dtype=q_ref.dtype)

    # sims[b, c] = <q_b, k_c> / scale  -> (TB, capacity), lane axis = capacity.
    sims = jax.lax.dot_general(
        qs, k_ref[...],
        dimension_numbers=(((1,), (1,)), ((), ())),
        preferred_element_type=jnp.float32,
    )

    # Mask columns >= item_count (emulates keys[:item_count] slicing).
    col = jax.lax.broadcasted_iota(jnp.int32, sims.shape, 1)
    sims = jnp.where(col < count, sims, jnp.float32(-1e30))

    # Masked softmax over the lane-dense capacity axis, all in f32.  When
    # count > 0 the -1e30 fill plus max-subtraction drives masked exps to 0.
    m = jnp.max(sims, axis=-1, keepdims=True)
    e = jnp.exp(sims - m)
    denom = jnp.sum(e, axis=-1, keepdims=True)        # >= 1 always
    w = e * pl.reciprocal(denom)                      # (TB, capacity), exact recip

    if values_lane_dense:
        # value_dim == 1: VPU broadcast-multiply + XLU lane reduce, no MXU call.
        out = jnp.sum(w * v_ref[...].astype(jnp.float32), axis=-1, keepdims=True)
    else:
        # (TB, capacity) @ (capacity, value_dim) on the MXU.
        out = jnp.dot(w.astype(v_ref.dtype), v_ref[...],
                      preferred_element_type=jnp.float32)

    # item_count == 0 -> the torch module returns zeros; gate with one scalar.
    out = jnp.where(count > 0, out, 0.0)
    o_ref[...] = out.astype(o_ref.dtype)


def hopfield_forward_prepared(query, mem: PreparedMemory, item_count):
    """Associative retrieval against a prepare_memory() result.

    query:      (key_dim,) or (B, key_dim)
    item_count: python int or traced int32 scalar (masked inside the kernel)
    Returns (value_dim,) for a 1-D query, (B, value_dim) for a batch.
    """
    single = (query.ndim == 1)
    q = query[None, :] if single else query
    value_dim = mem.value_dim

    # Dimension-mismatch handling is a static shape check, as in the torch module.
    if q.shape[-1] != mem.key_dim:
        out = jnp.zeros((q.shape[0], value_dim), jnp.float32)
        return out[0] if single else out

    batch = q.shape[0]
    q = q.astype(mem.keys.dtype)
    bf16 = (mem.keys.dtype == jnp.bfloat16)
    sublane = 16 if bf16 else 8

    # Whole batch in one grid step when small; otherwise MXU-sized tiles so the
    # grid still has >= 2 independent steps for megacore sharding on v7x.
    if batch <= 512:
        tile = _round_up(max(batch, 1), sublane)
    else:
        tile = 256 if bf16 else 128
    padded = _round_up(batch, tile)
    if padded != batch:
        q = jnp.pad(q, ((0, padded - batch), (0, 0)))

    # item_count travels as a scalar-prefetch SMEM value: masking happens in
    # the kernel, so this stays correct with a traced count under jax.jit.
    count = jnp.asarray(item_count, dtype=jnp.int32).reshape(1)
    inv_scale = 1.0 / math.sqrt(float(mem.key_dim))
    values_lane_dense = (value_dim == 1)

    itemsize = q.dtype.itemsize
    cost = pl.CostEstimate(
        flops=2 * padded * mem.capacity * (mem.key_dim + value_dim),
        transcendentals=padded * mem.capacity,
        bytes_accessed=(padded * mem.key_dim * itemsize
                        + mem.keys.size * mem.keys.dtype.itemsize
                        + mem.values.size * mem.values.dtype.itemsize
                        + padded * value_dim * 4),
    )

    # TODO(synk): for very large capacities (keys+values no longer fit VMEM,
    # especially on v7x's 64 MiB), add a second "arbitrary" capacity grid axis
    # with an online-softmax (m/l/acc) scratch accumulator.
    out = pl.pallas_call(
        functools.partial(_hopfield_kernel, inv_scale=inv_scale,
                          values_lane_dense=values_lane_dense),
        out_shape=jax.ShapeDtypeStruct((padded, value_dim), jnp.float32),
        grid_spec=pltpu.PrefetchScalarGridSpec(
            num_scalar_prefetch=1,
            grid=(padded // tile,),
            in_specs=[
                pl.BlockSpec((tile, mem.key_dim), lambda b, count_ref: (b, 0)),
                # Grid-invariant memory: whole-array VMEM residents
                # (single-buffered, no per-step DMA).
                pl.BlockSpec(memory_space=pltpu.MemorySpace.VMEM),
                pl.BlockSpec(memory_space=pltpu.MemorySpace.VMEM),
            ],
            out_specs=pl.BlockSpec((tile, value_dim),
                                   lambda b, count_ref: (b, 0)),
        ),
        compiler_params=pltpu.CompilerParams(
            # Batch tiles are independent -> lets the two v7x TCs split the grid.
            dimension_semantics=("parallel",),
        ),
        cost_estimate=cost,
    )(count, q, mem.keys, mem.values)

    out = out[:batch]
    return out[0] if single else out


def hopfield_forward(query, keys, values, item_count, *, use_bf16=False):
    """Convenience wrapper matching HopfieldMemory.forward.

    Prefer prepare_memory() + hopfield_forward_prepared() so the memory-side
    cast / relayout is hoisted out of the per-query path.
    """
    mem = prepare_memory(keys, values, use_bf16=use_bf16)
    return hopfield_forward_prepared(query, mem, item_count)


# TODO(synk): write() (stateful buffer mutation / dynamic resize) and
# hopfield_uncertainty() (returns a python float) are host-side state/scalar
# logic, not kernels; they are intentionally not implemented here.


def _reference_forward(query, keys, values, item_count):
    value_dim = values.shape[1]
    if item_count == 0:
        return jnp.zeros((value_dim,), jnp.float32)
    ak = keys[:item_count]
    av = values[:item_count]
    sims = ak @ query / math.sqrt(float(keys.shape[1]))
    w = jax.nn.softmax(sims, axis=0)
    return (w[:, None] * av).sum(0)


if __name__ == "__main__":
    # Module-implied shapes (kept small): capacity=128, key_dim=64, value_dim=1.
    capacity, key_dim, value_dim = 128, 64, 1
    item_count = 10          # memory has had 10 writes
    batch = 5                # deliberately not a multiple of 8 (exercises padding)

    root = jax.random.PRNGKey(0)
    kq, kk, kv, kv2 = jax.random.split(root, 4)

    # Buffers start as zeros (as in __init__); the first `item_count` rows have
    # been "written" with deterministic random key/value pairs.
    keys_buf = jnp.zeros((capacity, key_dim), jnp.float32)
    vals_buf = jnp.zeros((capacity, value_dim), jnp.float32)
    keys_buf = keys_buf.at[:item_count].set(
        jax.random.normal(kk, (item_count, key_dim), jnp.float32))
    vals_buf = vals_buf.at[:item_count].set(
        jax.random.normal(kv, (item_count, value_dim), jnp.float32))
    queries = jax.random.normal(kq, (batch, key_dim), jnp.float32)

    ref = jnp.stack([_reference_forward(queries[b], keys_buf, vals_buf, item_count)
                     for b in range(batch)])

    # --- batched f32 path, memory prepared once (hoisted cast / relayout) ---
    mem = prepare_memory(keys_buf, vals_buf)
    out = jax.block_until_ready(hopfield_forward_prepared(queries, mem, item_count))
    assert out.shape == (batch, value_dim), out.shape
    assert jnp.allclose(out, ref, atol=2e-3, rtol=2e-3), (out, ref)

    # --- single-query path (matches the torch forward signature) ---
    out1 = jax.block_until_ready(
        hopfield_forward(queries[0], keys_buf, vals_buf, item_count))
    assert out1.shape == (value_dim,)
    assert jnp.allclose(out1, ref[0], atol=2e-3, rtol=2e-3), (out1, ref[0])

    # --- empty memory handled inside the kernel (traced-count safe) ---
    out_empty = jax.block_until_ready(
        hopfield_forward(queries[0], keys_buf, vals_buf, 0))
    assert jnp.allclose(out_empty, jnp.zeros((value_dim,), jnp.float32)), out_empty

    # --- bf16 matmul path (memory cast once; softmax math stays in f32) ---
    mem_bf16 = prepare_memory(keys_buf, vals_buf, use_bf16=True)
    out_bf16 = jax.block_until_ready(
        hopfield_forward_prepared(queries, mem_bf16, item_count))
    assert jnp.allclose(out_bf16, ref, atol=1e-1, rtol=1e-1), (out_bf16, ref)

    # --- value_dim > 1 exercises the MXU weighted-sum path ---
    vd = 4
    vals4 = jnp.zeros((capacity, vd), jnp.float32).at[:item_count].set(
        jax.random.normal(kv2, (item_count, vd), jnp.float32))
    ref4 = jnp.stack([_reference_forward(queries[b], keys_buf, vals4, item_count)
                      for b in range(batch)])
    out4 = jax.block_until_ready(
        hopfield_forward(queries, keys_buf, vals4, item_count))
    assert out4.shape == (batch, vd), out4.shape
    assert jnp.allclose(out4, ref4, atol=2e-3, rtol=2e-3), (out4, ref4)

    print("KERNEL_OK")
</pallas_src>

<mosaic_0001>
module attributes {stable_mosaic.version = 11 : i64} {
  func.func @_hopfield_kernel(%arg0: i32, %arg1: memref<1xi32, #tpu.memory_space<smem>>, %arg2: memref<8x64xf32, #tpu.memory_space<vmem>>, %arg3: memref<128x64xf32, #tpu.memory_space<vmem>>, %arg4: memref<1x128xf32, #tpu.memory_space<vmem>>, %arg5: memref<8x1xf32, #tpu.memory_space<vmem>>) attributes {dimension_semantics = [#tpu.dimension_semantics<parallel>], iteration_bounds = array<i64: 1>, scalar_prefetch = 1 : i64, scratch_operands = 0 : i64, tpu.core_type = #tpu.core_type<tc>, window_params = [{transform_indices = @transform_0, window_bounds = array<i64: 8, 64>}, {pipeline_mode = #tpu.pipeline_mode<synchronous>, transform_indices = @transform_1, window_bounds = array<i64: 128, 64>}, {pipeline_mode = #tpu.pipeline_mode<synchronous>, transform_indices = @transform_2, window_bounds = array<i64: 1, 128>}, {transform_indices = @transform_3, window_bounds = array<i64: 8, 1>}]} {
    %c0 = arith.constant 0 : index
    %0 = memref.load %arg1[%c0] : memref<1xi32, #tpu.memory_space<smem>>
    %c0_0 = arith.constant 0 : index
    %c0_1 = arith.constant 0 : index
    %1 = vector.load %arg2[%c0_0, %c0_1] : memref<8x64xf32, #tpu.memory_space<vmem>>, vector<8x64xf32>
    %cst = arith.constant 1.250000e-01 : f32
    %2 = vector.broadcast %cst : f32 to vector<8x64xf32>
    %3 = arith.mulf %1, %2 : vector<8x64xf32>
    %c0_2 = arith.constant 0 : index
    %c0_3 = arith.constant 0 : index
    %4 = vector.load %arg3[%c0_2, %c0_3] : memref<128x64xf32, #tpu.memory_space<vmem>>, vector<128x64xf32>
    %cst_4 = arith.constant dense<0.000000e+00> : vector<8x128xf32>
    %5 = tpu.matmul %3, %4, %cst_4 {dimension_numbers = #tpu.dot_dimension_numbers<[1], [1], [0], [0], [0, 0, 1, 0], [], []>} : vector<8x64xf32>, vector<128x64xf32>, vector<8x128xf32> -> vector<8x128xf32>
    %6 = tpu.iota {dimensions = array<i32: 1>} : vector<8x128xi32>
    %7 = vector.broadcast %0 : i32 to vector<8x128xi32>
    %8 = arith.cmpi slt, %6, %7 : vector<8x128xi32>
    %cst_5 = arith.constant -1.000000e+30 : f32
    %9 = vector.broadcast %cst_5 : f32 to vector<8x128xf32>
    %10 = arith.select %8, %5, %9 : vector<8x128xi1>, vector<8x128xf32>
    %cst_6 = arith.constant dense<0xFF800000> : vector<8xf32>
    %11 = vector.multi_reduction <maximumf>, %10, %cst_6 [1] : vector<8x128xf32> to vector<8xf32>
    %12 = vector.shape_cast %11 : vector<8xf32> to vector<8x1xf32>
    %13 = vector.broadcast %12 : vector<8x1xf32> to vector<8x128xf32>
    %14 = arith.subf %10, %13 : vector<8x128xf32>
    %15 = math.exp %14 : vector<8x128xf32>
    %cst_7 = arith.constant dense<0.000000e+00> : vector<8xf32>
    %16 = vector.multi_reduction <add>, %15, %cst_7 [1] : vector<8x128xf32> to vector<8xf32>
    %17 = vector.shape_cast %16 : vector<8xf32> to vector<8x1xf32>
    %18 = tpu.reciprocal %17 : vector<8x1xf32> -> vector<8x1xf32>
    %19 = vector.broadcast %18 : vector<8x1xf32> to vector<8x128xf32>
    %20 = arith.mulf %15, %19 : vector<8x128xf32>
    %c0_8 = arith.constant 0 : index
    %c0_9 = arith.constant 0 : index
    %21 = vector.load %arg4[%c0_8, %c0_9] : memref<1x128xf32, #tpu.memory_space<vmem>>, vector<1x128xf32>
    %22 = vector.broadcast %21 : vector<1x128xf32> to vector<8x128xf32>
    %23 = arith.mulf %20, %22 : vector<8x128xf32>
    %cst_10 = arith.constant dense<0.000000e+00> : vector<8xf32>
    %24 = vector.multi_reduction <add>, %23, %cst_10 [1] : vector<8x128xf32> to vector<8xf32>
    %25 = vector.shape_cast %24 : vector<8xf32> to vector<8x1xf32>
    %c0_i32 = arith.constant 0 : i32
    %26 = arith.cmpi sgt, %0, %c0_i32 : i32
    %cst_11 = arith.constant 0.000000e+00 : f32
    %27 = vector.broadcast %cst_11 : f32 to vector<8x1xf32>
    %28 = arith.select %26, %25, %27 : vector<8x1xf32>
    %c0_12 = arith.constant 0 : index
    %c0_13 = arith.constant 0 : index
    %29 = vector.load %arg5[%c0_12, %c0_13] : memref<8x1xf32, #tpu.memory_space<vmem>>, vector<8x1xf32>
    tpu.vector_store %arg5[%c0_12, %c0_13], %28 {strides = array<i32>} : memref<8x1xf32, #tpu.memory_space<vmem>>, vector<8x1xf32>,
    return
  }
  func.func @transform_0(%arg0: i32, %arg1: memref<1xi32, #tpu.memory_space<smem>>) -> (i32, i32) {
    %c0_i32 = arith.constant 0 : i32
    %c0_i32_0 = arith.constant 0 : i32
    return %arg0, %c0_i32 : i32, i32
  }
  func.func @transform_1(%arg0: i32, %arg1: memref<1xi32, #tpu.memory_space<smem>>) -> (i32, i32) {
    %c0_i32 = arith.constant 0 : i32
    %c0_i32_0 = arith.constant 0 : i32
    %c0_i32_1 = arith.constant 0 : i32
    return %c0_i32, %c0_i32_0 : i32, i32
  }
  func.func @transform_2(%arg0: i32, %arg1: memref<1xi32, #tpu.memory_space<smem>>) -> (i32, i32) {
    %c0_i32 = arith.constant 0 : i32
    %c0_i32_0 = arith.constant 0 : i32
    %c0_i32_1 = arith.constant 0 : i32
    return %c0_i32, %c0_i32_0 : i32, i32
  }
  func.func @transform_3(%arg0: i32, %arg1: memref<1xi32, #tpu.memory_space<smem>>) -> (i32, i32) {
    %c0_i32 = arith.constant 0 : i32
    %c0_i32_0 = arith.constant 0 : i32
    return %arg0, %c0_i32 : i32, i32
  }
}

</mosaic_0001>

<llo_original>
// kernel: tpu_custom_call.1
$region0: #{tpu_custom_call.1}
  #allocation0 [shape = 'u32[]', space=smem, size = 0x4, offset = 0x4, fixed_abs, tag = 'smem constant byte address 0x4 - core index']
  #allocation1 [shape = 'u32[72,128]{1,0:T(1,128)}', space=vmem, size = 0x9000, scoped, tag = 'internal scratch']
  #allocation2 [shape = 's32[1]{0}', space=sflag, size = 0x4, scoped, tag = 'scoped memory for tpu_custom_call.1']
  #allocation3 [shape = 's32[1]{0:T(128)S(6)}', space=smem, size = 0x200, scoped, tag = 'prefetched SMEM operand 0']
  %s0 = inlined_call_operand.<no memory space> [shape: s32[1], index: 0, kind: input, shape index: {}]
  %s1 = inlined_call_operand.vmem [shape: f32[8,64], index: 1, kind: input, shape index: {}]
  %s2 = inlined_call_operand.vmem [shape: f32[128,64], index: 2, kind: input, shape index: {}]
  %s3 = inlined_call_operand.vmem [shape: f32[1,128], index: 3, kind: input, shape index: {}]
  %s4 = inlined_call_operand.vmem [shape: f32[8,1], index: 4, kind: output, shape index: {}]
  %s5 = sld [smem:[#allocation0]]
  $region22: #{tpu_custom_call.1} parent=0
    _
  %s7 = ssub.s32 1, %s5
  %s8 = scalar_select 0, %s7, %s5
  %9 = sst [smem:[#allocation3]] %s0
  // Predicated region
  $region2: #{tpu_custom_call.1} parent=0 // pred_check
    _
  $region3: #{tpu_custom_call.1} parent=0 // pred_check_branch
    %11 = sbr.rel (0) target = $region5
  $region4: #{tpu_custom_call.1} parent=0 // pred_region
    _
  $region5: #{tpu_custom_call.1} parent=0 // pred_fallthru
    _
  // Predicated region
  $region6: #{tpu_custom_call.1} parent=0 // pred_check
    _
  $region7: #{tpu_custom_call.1} parent=0 // pred_check_branch
    %13 = sbr.rel (0) target = $region9
  $region8: #{tpu_custom_call.1} parent=0 // pred_region
    _
  $region9: #{tpu_custom_call.1} parent=0 // pred_fallthru
    _
  // Predicated region
  $region10: #{tpu_custom_call.1} parent=0 // pred_check
    _
  $region11: #{tpu_custom_call.1} parent=0 // pred_check_branch
    %15 = sbr.rel (0) target = $region13
  $region12: #{tpu_custom_call.1} parent=0 // pred_region
    _
  $region13: #{tpu_custom_call.1} parent=0 // pred_fallthru
    _
  %s16 = sld [smem:[#allocation3]]
  %v17 = vld [vmem:[%s1] sm:$0xff]
  %v18 = vmul.f32 %v17, 0.125
  %v19 = vld [vmem:[%s2] sm:$0xff]
  %v20 = vld [vmem:[%s2 + $0x8] sm:$0xff]
  %v21 = vld [vmem:[%s2 + $0x10] sm:$0xff]
  %v22 = vld [vmem:[%s2 + $0x18] sm:$0xff]
  %v23 = vld [vmem:[%s2 + $0x20] sm:$0xff]
  %v24 = vld [vmem:[%s2 + $0x28] sm:$0xff]
  %v25 = vld [vmem:[%s2 + $0x30] sm:$0xff]
  %v26 = vld [vmem:[%s2 + $0x38] sm:$0xff]
  %v27 = vld [vmem:[%s2 + $0x40] sm:$0xff]
  %v28 = vld [vmem:[%s2 + $0x48] sm:$0xff]
  %v29 = vld [vmem:[%s2 + $0x50] sm:$0xff]
  %v30 = vld [vmem:[%s2 + $0x58] sm:$0xff]
  %v31 = vld [vmem:[%s2 + $0x60] sm:$0xff]
  %v32 = vld [vmem:[%s2 + $0x68] sm:$0xff]
  %v33 = vld [vmem:[%s2 + $0x70] sm:$0xff]
  %v34 = vld [vmem:[%s2 + $0x78] sm:$0xff]
  %vm35 = vcmask 523264
  %v37 = vsel %vm35, %v18, 0
  %v40 = vsel %vm35, %v19, 0
  %v43 = vsel %vm35, %v20, 0
  %v46 = vsel %vm35, %v21, 0
  %v49 = vsel %vm35, %v22, 0
  %v52 = vsel %vm35, %v23, 0
  %v55 = vsel %vm35, %v24, 0
  %v58 = vsel %vm35, %v25, 0
  %v61 = vsel %vm35, %v26, 0
  %v64 = vsel %vm35, %v27, 0
  %v67 = vsel %vm35, %v28, 0
  %v70 = vsel %vm35, %v29, 0
  %v73 = vsel %vm35, %v30, 0
  %v76 = vsel %vm35, %v31, 0
  %v79 = vsel %vm35, %v32, 0
  %v82 = vsel %vm35, %v33, 0
  %v85 = vsel %vm35, %v34, 0
  %87 = vmatpush.xpose.msra.mxu0 %v85
  %88 = vmatpush.xpose.msra.mxu0 %v82
  %89 = vmatpush.xpose.msra.mxu0 %v79
  %90 = vmatpush.xpose.msra.mxu0 %v76
  %91 = vmatpush.xpose.msra.mxu0 %v73
  %92 = vmatpush.xpose.msra.mxu0 %v70
  %93 = vmatpush.xpose.msra.mxu0 %v67
  %94 = vmatpush.xpose.msra.mxu0 %v64
  %95 = vmatpush.xpose.msra.mxu0 %v61
  %96 = vmatpush.xpose.msra.mxu0 %v58
  %97 = vmatpush.xpose.msra.mxu0 %v55
  %98 = vmatpush.xpose.msra.mxu0 %v52
  %99 = vmatpush.xpose.msra.mxu0 %v49
  %100 = vmatpush.xpose.msra.mxu0 %v46
  %101 = vmatpush.xpose.msra.mxu0 %v43
  %102 = vmatpush.xpose.msra.mxu0 %v40
  %103 = vmatmul.f32.gmra.mxu0 %v37
  %v104 = vpop.f32.mrf.mxu0
  %v105 = vadd.f32 0.0, %v104
  %106 = vdwg.mxu0
  %v107 = vlaneseq
  %v108 = vand.u32 %v107, 127
  %v109 = vstv %s16
  %vm110 = vcmp.lt.s32.totalorder %v108, %v109
  %v111 = vsel %vm110, %v105, -1e+30
  %112 = vmax.xlane.f32.xlu0 %v111
  %v113 = vpop.xlane.xlu0 %112
  %v114 = vsub.f32 %v111, %v113
  %v115 = vmul.f32 %v114, 1.442695
  %v116 = vpow.pop %v115
  %117 = vadd.xlane.f32.xlu0 %v116
  %v118 = vpop.xlane.xlu0 %117
  %v119 = vrcp.pop %v118
  %v120 = vmul.f32 %v118, %v119
  %v121 = vsub.f32 1.0, %v120
  %v122 = vmul.f32 %v119, %v121
  %v123 = vadd.f32 %v119, %v122
  %vm124 = vweird.f32 %v118
  %vm125 = vweird.f32 %v119
  %vm126 = vmor %vm124, %vm125
  %v127 = vsel %vm126, %v119, %v123
  %v128 = vand.u32 2147483647, %v118
  %vm129 = vcmp.eq.f32.partialorder %v128, 8.507059e+37
  %v130 = vand.u32 %v118, 2147483648
  %v131 = vor.u32 1.1754944e-38, %v130
  %v132 = vsel %vm129, %v131, %v127
  %v133 = vmul.f32 %v116, %v132
  %v134 = vld [vmem:[%s3] sm:$0x1]
  %v136 = vperm.slane %v134, 0
  %v138 = vmul.f32 %v133, %v136
  %139 = vadd.xlane.f32.xlu0 %v138
  %v140 = vpop.xlane.xlu0 %139
  %p141 = scmp.gt.s32.totalorder %s16, 0
  %s142 = scalar_select %p141, 1, 0
  %v143 = vstv %s142
  %vm144 = vcmp.eq.s32.totalorder %v143, 1
  %v145 = vsel %vm144, %v140, 0.0
  %vm146 = vcmask 7168
  %147 = vst.msk [vmem:[%s4] sm:$0xff] %vm146, %v145
  // Predicated region
  $region14: #{tpu_custom_call.1} parent=0 // pred_check
    _
  $region15: #{tpu_custom_call.1} parent=0 // pred_check_branch
    %149 = sbr.rel (0) target = $region17
  $region16: #{tpu_custom_call.1} parent=0 // pred_region
    _
  $region17: #{tpu_custom_call.1} parent=0 // pred_fallthru
    _
  // Predicated region
  $region18: #{tpu_custom_call.1} parent=0 // pred_check
    _
  $region19: #{tpu_custom_call.1} parent=0 // pred_check_branch
    %151 = sbr.rel (0) target = $region21
  $region20: #{tpu_custom_call.1} parent=0 // pred_region
    _
  $region21: #{tpu_custom_call.1} parent=0 // pred_fallthru
    _

</llo_original>
